<compile_context>
chip_gen: v7x
topology: tpu7x:2x2x1
jax: 0.10.0
libtpu: 0.0.40
codegen_flags: <defaults>
</compile_context>

<pallas_src>
import functools

import jax
import jax.numpy as jnp
from jax import lax
from jax.experimental import pallas as pl
from jax.experimental.pallas import tpu as pltpu

_LANES = 128
_SUBLANES = 8


def _detect_num_tensorcores() -> int:
    """Per-chip TensorCore count (2 on v7x, else 1). Conservative default 1."""
    try:
        info = pltpu.get_tpu_info()
        for name in ("num_tensorcores", "tensorcores_per_chip",
                     "num_cores_per_chip", "cores_per_chip"):
            v = getattr(info, name, None)
            if isinstance(v, int) and v >= 1:
                return int(v)
    except Exception:
        pass
    try:
        kind = jax.devices()[0].device_kind.lower()
        if "v7" in kind:
            return 2
    except Exception:
        pass
    return 1


def _target_block_bytes() -> int:
    """Per-input block bytes: ~4 MiB on v6e/v7x, ~2 MiB elsewhere (v5e-safe)."""
    try:
        kind = jax.devices()[0].device_kind.lower()
        if ("v6" in kind) or ("v7" in kind):
            return 4 << 20
    except Exception:
        pass
    return 2 << 20


def _psnr_sse_kernel(x_ref, y_ref, out_ref, *, valid_rows):
    """Accumulate a per-shard (8,128) partial sum of squared error."""
    c = pl.program_id(0)          # shard axis (core-parallel on v7x)
    i = pl.program_id(1)          # streaming step within the shard (reduction)

    @pl.when(i == 0)
    def _init():
        out_ref[...] = jnp.zeros_like(out_ref)

    block_rows = x_ref.shape[0]
    # Unclamped global block index: clamped duplicate blocks (when
    # n_shards*steps > total_blocks) get row_start >= valid_rows and are
    # fully masked to zero.
    global_block = c * pl.num_programs(1) + i
    row_start = global_block * block_rows

    # Common hot-path compute: native-dtype load, f32 cast, sub, square.
    xf = x_ref[...].astype(jnp.float32)
    yf = y_ref[...].astype(jnp.float32)
    d = xf - yf
    d2 = d * d

    def _accumulate(vals):
        # vreg-shaped partial sum: (block_rows,128) -> (n,8,128) -> (8,128).
        # Tile-aligned reshape (block_rows % 8 == 0); axis-0 sum is pure VPU.
        partial = vals.reshape(block_rows // _SUBLANES, _SUBLANES, _LANES).sum(axis=0)
        out_ref[...] += partial[None, :, :]

    needs_mask = row_start + block_rows > valid_rows

    @pl.when(jnp.logical_not(needs_mask))
    def _fast():
        # Fully-valid block: no iota / compare / select in the hot path.
        _accumulate(d2)

    @pl.when(needs_mask)
    def _masked():
        # Only the last (or clamped duplicate) block per shard pays the mask.
        # Select runs AFTER the square, so garbage (even NaN/Inf) in Pallas
        # edge-block padding cannot propagate.
        row_ids = row_start + lax.broadcasted_iota(jnp.int32, (block_rows, 1), 0)
        _accumulate(jnp.where(row_ids < valid_rows, d2, 0.0))


def _sse_pallas(x2, y2, rows, block_rows, n_shards):
    """Sum of squared error over a (rows, 128) pair via the Pallas kernel."""
    total_blocks = pl.cdiv(rows, block_rows)
    n_shards = max(1, min(n_shards, total_blocks))
    steps = pl.cdiv(total_blocks, n_shards)

    def in_map(c, i):
        b = c * steps + i
        # Clamp so the auto-DMA stays in bounds; the duplicate block is
        # masked to zero in-kernel (unclamped index drives the mask).
        return (jnp.minimum(b, total_blocks - 1), 0)

    itemsize = x2.dtype.itemsize
    kernel_elems = rows * _LANES
    cost = pl.CostEstimate(flops=3 * kernel_elems, transcendentals=0,
                           bytes_accessed=2 * kernel_elems * itemsize)

    if n_shards > 1:
        semantics = (pltpu.CORE_PARALLEL, pltpu.ARBITRARY)
    else:
        semantics = (pltpu.ARBITRARY, pltpu.ARBITRARY)

    partials = pl.pallas_call(
        functools.partial(_psnr_sse_kernel, valid_rows=rows),
        out_shape=jax.ShapeDtypeStruct((n_shards, _SUBLANES, _LANES),
                                       jnp.float32),
        grid_spec=pltpu.PrefetchScalarGridSpec(
            num_scalar_prefetch=0,
            grid=(n_shards, steps),
            in_specs=[
                pl.BlockSpec((block_rows, _LANES), in_map),
                pl.BlockSpec((block_rows, _LANES), in_map),
            ],
            out_specs=pl.BlockSpec((1, _SUBLANES, _LANES),
                                   lambda c, i: (c, 0, 0)),
        ),
        compiler_params=pltpu.CompilerParams(dimension_semantics=semantics),
        cost_estimate=cost,
    )(x2, y2)

    return jnp.sum(partials)


def psnr_loss(x, y, max_val=1.0):
    """Pallas implementation of PSNRLoss.forward. Returns a scalar f32."""
    assert x.shape == y.shape, "x and y must have the same shape"
    total = int(x.size)
    assert total > 0
    assert total < 2**31, "int32 row indexing inside the kernel"

    x_flat = x.reshape(-1)        # metadata-only for contiguous inputs
    y_flat = y.reshape(-1)

    rem = total % _LANES          # ragged tail, < 128 elements
    bulk = total - rem
    rows = bulk // _LANES

    tail_sse = jnp.float32(0.0)
    if rem:
        xt = x_flat[bulk:].astype(jnp.float32)
        yt = y_flat[bulk:].astype(jnp.float32)
        tail_sse = jnp.sum((xt - yt) ** 2)

    if rows >= _SUBLANES:
        if rem:
            # Rare ragged path: prefix slice of the 128-aligned bulk.
            # TODO(synk): a 1-D BlockSpec + in-kernel reshape could avoid
            # this prefix-slice copy entirely for non-128-divisible totals.
            x_main = x_flat[:bulk]
            y_main = y_flat[:bulk]
        else:
            # Common path: copy-free metadata reshape.
            x_main = x_flat
            y_main = y_flat
        x2 = x_main.reshape(rows, _LANES)
        y2 = y_main.reshape(rows, _LANES)

        itemsize = x2.dtype.itemsize
        target_rows = max(_SUBLANES,
                          _target_block_bytes() // (_LANES * itemsize))
        block_rows = int(min(rows, target_rows))
        block_rows = max(_SUBLANES, (block_rows // _SUBLANES) * _SUBLANES)

        n_shards = min(2, _detect_num_tensorcores())
        sse = _sse_pallas(x2, y2, rows, block_rows, n_shards) + tail_sse
    else:
        # Tiny input (< ~1 KiB of rows): a kernel launch is not worth it.
        xf = x_flat[:bulk].astype(jnp.float32)
        yf = y_flat[:bulk].astype(jnp.float32)
        sse = jnp.sum((xf - yf) ** 2) + tail_sse

    mse = sse / jnp.float32(total)
    psnr = 10.0 * jnp.log10(jnp.float32(max_val) ** 2 / mse)
    return (1.0 / psnr).astype(jnp.float32)


if __name__ == "__main__":
    # Deterministic small inputs consistent with an NCHW image pair.
    key = jax.random.PRNGKey(0)
    kx, ky = jax.random.split(key)
    shape = (2, 4, 16, 16)  # batch=2, channels=4, spatial=16x16
    x = jax.random.uniform(kx, shape, dtype=jnp.float32)
    y = jax.random.uniform(ky, shape, dtype=jnp.float32)

    loss = psnr_loss(x, y, max_val=1.0)
    jax.block_until_ready(loss)

    # Sanity check against pure-JAX reference (aligned / mask-free path).
    mse = jnp.mean((x - y) ** 2)
    ref = 1.0 / (10.0 * jnp.log10(1.0 / mse))
    assert jnp.allclose(loss, ref, rtol=1e-5, atol=1e-7), (loss, ref)

    # Exercise the ragged (non-128-divisible) path and the in-kernel row mask.
    xr = jax.random.uniform(kx, (3, 5, 7, 11), dtype=jnp.float32)
    yr = jax.random.uniform(ky, (3, 5, 7, 11), dtype=jnp.float32)
    loss_r = psnr_loss(xr, yr, max_val=2.0)
    jax.block_until_ready(loss_r)
    mse_r = jnp.mean((xr - yr) ** 2)
    ref_r = 1.0 / (10.0 * jnp.log10(4.0 / mse_r))
    assert jnp.allclose(loss_r, ref_r, rtol=1e-5, atol=1e-7), (loss_r, ref_r)

    print("KERNEL_OK")
</pallas_src>

<mosaic_0001>
module attributes {stable_mosaic.version = 11 : i64} {
  func.func @_psnr_sse_kernel(%arg0: i32, %arg1: i32, %arg2: memref<16x128xf32, #tpu.memory_space<vmem>>, %arg3: memref<16x128xf32, #tpu.memory_space<vmem>>, %arg4: memref<1x8x128xf32, #tpu.memory_space<vmem>>) attributes {dimension_semantics = [#tpu.dimension_semantics<arbitrary>, #tpu.dimension_semantics<arbitrary>], iteration_bounds = array<i64: 1, 1>, scalar_prefetch = 0 : i64, scratch_operands = 0 : i64, tpu.core_type = #tpu.core_type<tc>, window_params = [{transform_indices = @transform_0, window_bounds = array<i64: 16, 128>}, {transform_indices = @transform_1, window_bounds = array<i64: 16, 128>}, {transform_indices = @transform_2, window_bounds = array<i64: 1, 8, 128>}]} {
    %c0_i32 = arith.constant 0 : i32
    %0 = arith.cmpi eq, %arg1, %c0_i32 : i32
    %1 = arith.extui %0 : i1 to i32
    %c0_i32_0 = arith.constant 0 : i32
    %2 = arith.cmpi ne, %1, %c0_i32_0 : i32
    scf.if %2 {
      %cst = arith.constant 0.000000e+00 : f32
      %17 = vector.broadcast %cst : f32 to vector<1x8x128xf32>
      %c0_8 = arith.constant 0 : index
      %c0_9 = arith.constant 0 : index
      %c0_10 = arith.constant 0 : index
      %18 = vector.load %arg4[%c0_8, %c0_9, %c0_10] : memref<1x8x128xf32, #tpu.memory_space<vmem>>, vector<1x8x128xf32>
      tpu.vector_store %arg4[%c0_8, %c0_9, %c0_10], %17 {strides = array<i32>} : memref<1x8x128xf32, #tpu.memory_space<vmem>>, vector<1x8x128xf32>,
    } else {
    }
    %c1_i32 = arith.constant 1 : i32
    %3 = arith.muli %arg0, %c1_i32 : i32
    %4 = arith.addi %3, %arg1 : i32
    %c16_i32 = arith.constant 16 : i32
    %5 = arith.muli %4, %c16_i32 : i32
    %c0 = arith.constant 0 : index
    %c0_1 = arith.constant 0 : index
    %6 = vector.load %arg2[%c0, %c0_1] : memref<16x128xf32, #tpu.memory_space<vmem>>, vector<16x128xf32>
    %c0_2 = arith.constant 0 : index
    %c0_3 = arith.constant 0 : index
    %7 = vector.load %arg3[%c0_2, %c0_3] : memref<16x128xf32, #tpu.memory_space<vmem>>, vector<16x128xf32>
    %8 = arith.subf %6, %7 : vector<16x128xf32>
    %9 = arith.mulf %8, %8 : vector<16x128xf32>
    %c16_i32_4 = arith.constant 16 : i32
    %10 = arith.addi %5, %c16_i32_4 : i32
    %c16_i32_5 = arith.constant 16 : i32
    %11 = arith.cmpi sgt, %10, %c16_i32_5 : i32
    %true = arith.constant true
    %12 = arith.xori %11, %true : i1
    %13 = arith.extui %12 : i1 to i32
    %c0_i32_6 = arith.constant 0 : i32
    %14 = arith.cmpi ne, %13, %c0_i32_6 : i32
    scf.if %14 {
      %17 = vector.shape_cast %9 : vector<16x128xf32> to vector<2x8x128xf32>
      %cst = arith.constant dense<0.000000e+00> : vector<8x128xf32>
      %18 = vector.multi_reduction <add>, %17, %cst [0] : vector<2x8x128xf32> to vector<8x128xf32>
      %c0_8 = arith.constant 0 : index
      %c0_9 = arith.constant 0 : index
      %c0_10 = arith.constant 0 : index
      %19 = vector.load %arg4[%c0_8, %c0_9, %c0_10] : memref<1x8x128xf32, #tpu.memory_space<vmem>>, vector<1x8x128xf32>
      %20 = vector.shape_cast %18 : vector<8x128xf32> to vector<1x8x128xf32>
      %21 = arith.addf %19, %20 : vector<1x8x128xf32>
      %c0_11 = arith.constant 0 : index
      %c0_12 = arith.constant 0 : index
      %c0_13 = arith.constant 0 : index
      %22 = vector.load %arg4[%c0_11, %c0_12, %c0_13] : memref<1x8x128xf32, #tpu.memory_space<vmem>>, vector<1x8x128xf32>
      tpu.vector_store %arg4[%c0_11, %c0_12, %c0_13], %21 {strides = array<i32>} : memref<1x8x128xf32, #tpu.memory_space<vmem>>, vector<1x8x128xf32>,
    } else {
    }
    %15 = arith.extui %11 : i1 to i32
    %c0_i32_7 = arith.constant 0 : i32
    %16 = arith.cmpi ne, %15, %c0_i32_7 : i32
    scf.if %16 {
      %17 = tpu.iota {dimensions = array<i32: 0>} : vector<16x1xi32>
      %18 = vector.broadcast %5 : i32 to vector<16x1xi32>
      %19 = arith.addi %18, %17 : vector<16x1xi32>
      %c16_i32_8 = arith.constant 16 : i32
      %20 = vector.broadcast %c16_i32_8 : i32 to vector<16x1xi32>
      %21 = arith.cmpi slt, %19, %20 : vector<16x1xi32>
      %cst = arith.constant 0.000000e+00 : f32
      %22 = vector.shape_cast %21 : vector<16x1xi1> to vector<16x1xi1>
      %23 = vector.broadcast %22 : vector<16x1xi1> to vector<16x128xi1>
      %24 = vector.broadcast %cst : f32 to vector<16x128xf32>
      %25 = arith.select %23, %9, %24 : vector<16x128xi1>, vector<16x128xf32>
      %26 = vector.shape_cast %25 : vector<16x128xf32> to vector<2x8x128xf32>
      %cst_9 = arith.constant dense<0.000000e+00> : vector<8x128xf32>
      %27 = vector.multi_reduction <add>, %26, %cst_9 [0] : vector<2x8x128xf32> to vector<8x128xf32>
      %c0_10 = arith.constant 0 : index
      %c0_11 = arith.constant 0 : index
      %c0_12 = arith.constant 0 : index
      %28 = vector.load %arg4[%c0_10, %c0_11, %c0_12] : memref<1x8x128xf32, #tpu.memory_space<vmem>>, vector<1x8x128xf32>
      %29 = vector.shape_cast %27 : vector<8x128xf32> to vector<1x8x128xf32>
      %30 = arith.addf %28, %29 : vector<1x8x128xf32>
      %c0_13 = arith.constant 0 : index
      %c0_14 = arith.constant 0 : index
      %c0_15 = arith.constant 0 : index
      %31 = vector.load %arg4[%c0_13, %c0_14, %c0_15] : memref<1x8x128xf32, #tpu.memory_space<vmem>>, vector<1x8x128xf32>
      tpu.vector_store %arg4[%c0_13, %c0_14, %c0_15], %30 {strides = array<i32>} : memref<1x8x128xf32, #tpu.memory_space<vmem>>, vector<1x8x128xf32>,
    } else {
    }
    return
  }
  func.func @transform_0(%arg0: i32, %arg1: i32) -> (i32, i32) {
    %c1_i32 = arith.constant 1 : i32
    %0 = arith.muli %arg0, %c1_i32 : i32
    %1 = arith.addi %0, %arg1 : i32
    %c0_i32 = arith.constant 0 : i32
    %2 = arith.minsi %1, %c0_i32 : i32
    %c0_i32_0 = arith.constant 0 : i32
    %c0_i32_1 = arith.constant 0 : i32
    return %2, %c0_i32_0 : i32, i32
  }
  func.func @transform_1(%arg0: i32, %arg1: i32) -> (i32, i32) {
    %c1_i32 = arith.constant 1 : i32
    %0 = arith.muli %arg0, %c1_i32 : i32
    %1 = arith.addi %0, %arg1 : i32
    %c0_i32 = arith.constant 0 : i32
    %2 = arith.minsi %1, %c0_i32 : i32
    %c0_i32_0 = arith.constant 0 : i32
    %c0_i32_1 = arith.constant 0 : i32
    return %2, %c0_i32_0 : i32, i32
  }
  func.func @transform_2(%arg0: i32, %arg1: i32) -> (i32, i32, i32) {
    %c0_i32 = arith.constant 0 : i32
    %c0_i32_0 = arith.constant 0 : i32
    %c0_i32_1 = arith.constant 0 : i32
    return %arg0, %c0_i32, %c0_i32_0 : i32, i32, i32
  }
}

</mosaic_0001>

<llo_original>
// kernel: tpu_custom_call.1
$region0: #{tpu_custom_call.1}
  #allocation0 [shape = 'u32[]', space=smem, size = 0x4, offset = 0x4, fixed_abs, tag = 'smem constant byte address 0x4 - core index']
  #allocation1 [shape = 'u32[144,128]{1,0:T(1,128)}', space=vmem, size = 0x12000, scoped, tag = 'internal scratch']
  %s0 = inlined_call_operand.hbm [shape: f32[16,128], index: 0, kind: input, shape index: {}]
  %s1 = inlined_call_operand.hbm [shape: f32[16,128], index: 1, kind: input, shape index: {}]
  %s2 = inlined_call_operand.hbm [shape: f32[1,8,128], index: 2, kind: output, shape index: {}]
  %s3 = sld [smem:[#allocation0]]
  $region38: #{tpu_custom_call.1} parent=0
    _
  %s5 = ssub.s32 1, %s3
  %s6 = scalar_select 0, %s5, %s3
  $region1: #{tpu_custom_call.1} parent=0
    #allocation2 [shape = 'u8[8192]{0}', space=vmem, size = 0x2000, scoped, tag = 'input window, operand 0, single buffered']
    #allocation3 [shape = 's32[1]{0}', space=sflag, size = 0x4, scoped, tag = 'scoped memory for tpu_custom_call.1']
    #allocation4 [shape = 's32[1]{0}', space=sflag, size = 0x4, scoped, tag = 'scoped memory for tpu_custom_call.1']
    #allocation5 [shape = 'u8[8192]{0}', space=vmem, size = 0x2000, scoped, tag = 'input window, operand 1, single buffered']
    #allocation6 [shape = 's32[1]{0}', space=sflag, size = 0x4, scoped, tag = 'scoped memory for tpu_custom_call.1']
    #allocation7 [shape = 'u8[4096]{0}', space=vmem, size = 0x1000, scoped, tag = 'output window, operand 0, single buffered']
    %7 = vsyncpa [#allocation3], 0
    %8 = vsyncpa [#allocation6], 0
    %9 = vsyncpa [#allocation4], 0
    // Predicated region
    $region2: #{tpu_custom_call.1} parent=1 // pred_check
      _
    $region3: #{tpu_custom_call.1} parent=1 // pred_check_branch
      %11 = sbr.rel (0) target = $region5
    $region4: #{tpu_custom_call.1} parent=1 // pred_region
      %s12 = sadd.s32 0, 0
      %p13 = scmp.lt.s32.totalorder %s12, 0
      %s14 = scalar_select %p13, %s12, 0
      %s15 = smul.u32 2, %s14
      %s17 = ssub.s32 256, 256
      %18 = vsyncadd [#allocation3], %s17
      %s19 = smul.addr %s15, 128
      %s20 = scalar_lea.hbm %s0, %s19
      %s21 = sshll.u32 [#allocation2], 4
      %s22 = int_to_ptr.vmem [resolvable:$true] %s21
      %27 = dma.hbm_to_vmem [thread:$0]  %s20, 256, %s22, [#allocation3], 128, 128, 8
    $region5: #{tpu_custom_call.1} parent=1 // pred_fallthru
      _
    // Predicated region
    $region6: #{tpu_custom_call.1} parent=1 // pred_check
      _
    $region7: #{tpu_custom_call.1} parent=1 // pred_check_branch
      %29 = sbr.rel (0) target = $region9
    $region8: #{tpu_custom_call.1} parent=1 // pred_region
      %s30 = sadd.s32 0, 0
      %p31 = scmp.lt.s32.totalorder %s30, 0
      %s32 = scalar_select %p31, %s30, 0
      %s33 = smul.u32 2, %s32
      %s35 = ssub.s32 256, 256
      %36 = vsyncadd [#allocation6], %s35
      %s37 = smul.addr %s33, 128
      %s38 = scalar_lea.hbm %s1, %s37
      %s39 = sshll.u32 [#allocation5], 4
      %s40 = int_to_ptr.vmem [resolvable:$true] %s39
      %45 = dma.hbm_to_vmem [thread:$0]  %s38, 256, %s40, [#allocation6], 128, 128, 8
    $region9: #{tpu_custom_call.1} parent=1 // pred_fallthru
      _
    // Predicated region
    $region10: #{tpu_custom_call.1} parent=1 // pred_check
      _
    $region11: #{tpu_custom_call.1} parent=1 // pred_check_branch
      %47 = sbr.rel (0) target = $region13
    $region12: #{tpu_custom_call.1} parent=1 // pred_region
      %48 = dma.done [#allocation3], 256
    $region13: #{tpu_custom_call.1} parent=1 // pred_fallthru
      _
    // Predicated region
    $region14: #{tpu_custom_call.1} parent=1 // pred_check
      _
    $region15: #{tpu_custom_call.1} parent=1 // pred_check_branch
      %50 = sbr.rel (0) target = $region17
    $region16: #{tpu_custom_call.1} parent=1 // pred_region
      %51 = dma.done [#allocation6], 256
    $region17: #{tpu_custom_call.1} parent=1 // pred_fallthru
      _
    %s52 = sadd.s32 0, 0
    %p53 = scmp.lt.s32.totalorder %s52, 0
    %s54 = scalar_select %p53, %s52, 0
    %s55 = smul.u32 2, %s54
    %s56 = sadd.s32 0, 0
    %p57 = scmp.lt.s32.totalorder %s56, 0
    %s58 = scalar_select %p57, %s56, 0
    %s59 = smul.u32 2, %s58
    %p60 = scmp.eq.s32.totalorder 0, 0
    // Predicated region
    $region18: #{tpu_custom_call.1} parent=1 // pred_check
      %p61 = pneg %p60
    $region19: #{tpu_custom_call.1} parent=1 // pred_check_branch
      %63 = sbr.rel (%p61) target = $region21
    $region20: #{tpu_custom_call.1} parent=1 // pred_region
      %64 = vst [vmem:[#allocation7] sm:$0xff] 0.0
    $region21: #{tpu_custom_call.1} parent=1 // pred_fallthru
      _
    %s65 = sadd.s32 0, 0
    %s66 = smul.u32 %s65, 16
    %v67 = vld [vmem:[#allocation2] sm:$0xff]
    %v68 = vld [vmem:[#allocation2 + $0x8] sm:$0xff]
    %v69 = vld [vmem:[#allocation5] sm:$0xff]
    %v70 = vld [vmem:[#allocation5 + $0x8] sm:$0xff]
    %v71 = vsub.f32 %v67, %v69
    %v72 = vsub.f32 %v68, %v70
    %v73 = vmul.f32 %v71, %v71
    %v74 = vmul.f32 %v72, %v72
    %s75 = sadd.s32 %s66, 16
    %p76 = scmp.gt.s32.totalorder %s75, 16
    %p77 = scmp.le.s32.totalorder %s75, 16
    // Predicated region
    $region22: #{tpu_custom_call.1} parent=1 // pred_check
      %p78 = pneg %p77
    $region23: #{tpu_custom_call.1} parent=1 // pred_check_branch
      %80 = sbr.rel (%p78) target = $region25
    $region24: #{tpu_custom_call.1} parent=1 // pred_region
      %v81 = vadd.f32 %v73, %v74
      %v82 = vld [vmem:[#allocation7] sm:$0xff]
      %v83 = vadd.f32 %v82, %v81
      %84 = vst [vmem:[#allocation7] sm:$0xff] %v83
    $region25: #{tpu_custom_call.1} parent=1 // pred_fallthru
      _
    // Predicated region
    $region26: #{tpu_custom_call.1} parent=1 // pred_check
      %p85 = pneg %p76
    $region27: #{tpu_custom_call.1} parent=1 // pred_check_branch
      %87 = sbr.rel (%p85) target = $region29
    $region28: #{tpu_custom_call.1} parent=1 // pred_region
      %v88 = vlaneseq
      %v89 = vshrl.u32 %v88, 7
      %v90 = vadd.s32 %v89, 8
      %v91 = vstv %s66
      %v92 = vadd.s32 %v91, %v89
      %v93 = vadd.s32 %v91, %v90
      %vm94 = vcmp.lt.s32.totalorder %v92, 16
      %vm95 = vcmp.lt.s32.totalorder %v93, 16
      %v96 = vsel %vm94, 1, 0
      %v97 = vsel %vm95, 1, 0
      %vm98 = vcmp.eq.s32.totalorder %v96, 1
      %vm99 = vcmp.eq.s32.totalorder %v97, 1
      %v100 = vsel %vm98, %v73, 0.0
      %v101 = vsel %vm99, %v74, 0.0
      %v102 = vadd.f32 %v100, %v101
      %v103 = vld [vmem:[#allocation7] sm:$0xff]
      %v104 = vadd.f32 %v103, %v102
      %105 = vst [vmem:[#allocation7] sm:$0xff] %v104
    $region29: #{tpu_custom_call.1} parent=1 // pred_fallthru
      _
    // Predicated region
    $region30: #{tpu_custom_call.1} parent=1 // pred_check
      _
    $region31: #{tpu_custom_call.1} parent=1 // pred_check_branch
      %107 = sbr.rel (0) target = $region33
    $region32: #{tpu_custom_call.1} parent=1 // pred_region
      %s109 = ssub.s32 128, 128
      %110 = vsyncadd [#allocation4], %s109
      %s112 = sshll.u32 [#allocation7], 4
      %s113 = int_to_ptr.vmem [resolvable:$true] %s112
      %115 = dma.vmem_to_hbm [thread:$0]  %s113, 128, %s2, [#allocation4]
    $region33: #{tpu_custom_call.1} parent=1 // pred_fallthru
      _
    // Predicated region
    $region34: #{tpu_custom_call.1} parent=1 // pred_check
      _
    $region35: #{tpu_custom_call.1} parent=1 // pred_check_branch
      %117 = sbr.rel (0) target = $region37
    $region36: #{tpu_custom_call.1} parent=1 // pred_region
      %118 = dma.done [#allocation4], 128
    $region37: #{tpu_custom_call.1} parent=1 // pred_fallthru
      _
    %119 = vsyncpa [#allocation3], 1
    %120 = vsyncpa [#allocation6], 1
    %121 = vsyncpa [#allocation4], 1

</llo_original>
